<compile_context>
chip_gen: v7x
topology: tpu7x:2x2x1
jax: 0.10.0
libtpu: 0.0.40
codegen_flags: <defaults>
</compile_context>

<pallas_src>
import functools

import jax
import jax.numpy as jnp
from jax.experimental import pallas as pl
from jax.experimental.pallas import tpu as pltpu


def actor_critic_kernel(obs_ref, w1_ref, b1_ref, wh_ref, bh_ref, out_ref,
                        *, n_acts):
    # obs.float()
    obs = obs_ref[...].astype(jnp.float32)

    # features: Linear(input_dim, n_hidden) + ReLU
    h = jnp.dot(obs, w1_ref[...], preferred_element_type=jnp.float32) + b1_ref[...]
    h = jnp.maximum(h, 0.0)

    # fused heads: one [B, P] matmul; lanes [0, A) = policy logits,
    # lane A = value, lanes > A = zero padding.
    z = jnp.dot(h, wh_ref[...], preferred_element_type=jnp.float32) + bh_ref[...]

    # Softmax(dim=0): normalize each column over the batch axis (exact divide).
    m = jnp.max(z, axis=0, keepdims=True)
    e = jnp.exp(z - m)
    denom = jnp.sum(e, axis=0, keepdims=True)
    sm = e / denom

    # Keep softmax only on the policy lanes; value / padding lanes pass raw z.
    lane = jax.lax.broadcasted_iota(jnp.int32, z.shape, dimension=1)
    out_ref[...] = jnp.where(lane < n_acts, sm, z)


def actor_critic_forward(obs, packed_params, n_acts):
    """Single forward step: flat (grid-less) whole-array VMEM kernel."""
    w1, b1, w_heads, b_heads = packed_params
    B = obs.shape[0]
    P = w_heads.shape[1]

    vmem = pl.BlockSpec(memory_space=pltpu.MemorySpace.VMEM)
    out = pl.pallas_call(
        functools.partial(actor_critic_kernel, n_acts=n_acts),
        out_shape=jax.ShapeDtypeStruct((B, P), jnp.float32),
        in_specs=[vmem, vmem, vmem, vmem, vmem],
        out_specs=vmem,
    )(obs, w1, b1, w_heads, b_heads)

    probs = out[:, :n_acts]
    value = out[:, n_acts:n_acts + 1]
    return probs, value


def actor_critic_forward_batched(obs_t, packed_params, n_acts):
    """T independent forward steps in one pallas_call.

    Leading "parallel" grid axis over T amortizes launch overhead and shards
    across v7x's two TensorCores. Softmax(dim=0) stays per-step because each
    grid step owns a full [B, P] tile.
    """
    w1, b1, w_heads, b_heads = packed_params
    T, B, D = obs_t.shape
    H = w1.shape[1]
    P = w_heads.shape[1]

    out = pl.pallas_call(
        functools.partial(actor_critic_kernel, n_acts=n_acts),
        out_shape=jax.ShapeDtypeStruct((T, B, P), jnp.float32),
        grid=(T,),
        in_specs=[
            pl.BlockSpec((None, B, D), lambda t: (t, 0, 0)),   # per-step obs tile
            pl.BlockSpec((D, H), lambda t: (0, 0)),            # shared weights
            pl.BlockSpec((1, H), lambda t: (0, 0)),
            pl.BlockSpec((H, P), lambda t: (0, 0)),
            pl.BlockSpec((1, P), lambda t: (0, 0)),
        ],
        out_specs=pl.BlockSpec((None, B, P), lambda t: (t, 0, 0)),
        compiler_params=pltpu.CompilerParams(
            dimension_semantics=("parallel",)),
    )(obs_t, w1, b1, w_heads, b_heads)

    probs = out[..., :n_acts]
    value = out[..., n_acts:n_acts + 1]
    return probs, value


def pack_head_params(params):
    """One-time packing of the two heads into a single lane-dense [H, 128] matmul.

    Called at param init / update time, NOT per forward call.
    """
    w1, b1, wp, bp, wv, bv = params
    H = w1.shape[1]
    A = wp.shape[1]
    P = ((A + 1 + 127) // 128) * 128
    pad = P - (A + 1)
    w_heads = jnp.concatenate(
        [wp, wv, jnp.zeros((H, pad), jnp.float32)], axis=1)      # [H, P]
    b_heads = jnp.concatenate(
        [bp, bv, jnp.zeros((1, pad), jnp.float32)], axis=1)      # [1, P]
    return (w1, b1, w_heads, b_heads)


def init_params(key, input_dim, n_acts, n_hidden):
    """Deterministic init mimicking PyTorch's default U(-1/sqrt(fan_in), 1/sqrt(fan_in))."""
    k1, k2, k3, k4, k5, k6 = jax.random.split(key, 6)

    def unif(k, shape, fan_in):
        bound = 1.0 / jnp.sqrt(jnp.float32(fan_in))
        return jax.random.uniform(k, shape, jnp.float32, -bound, bound)

    w1 = unif(k1, (input_dim, n_hidden), input_dim)   # stored [in, out]
    b1 = unif(k2, (1, n_hidden), input_dim)
    wp = unif(k3, (n_hidden, n_acts), n_hidden)
    bp = unif(k4, (1, n_acts), n_hidden)
    wv = unif(k5, (n_hidden, 1), n_hidden)
    bv = unif(k6, (1, 1), n_hidden)
    return (w1, b1, wp, bp, wv, bv)


def reference_forward(obs, params):
    """Pure-JAX reference for correctness check."""
    w1, b1, wp, bp, wv, bv = params
    h = jnp.maximum(obs.astype(jnp.float32) @ w1 + b1, 0.0)
    logits = h @ wp + bp
    probs = jax.nn.softmax(logits, axis=0)   # Softmax(dim=0), as in the module
    value = h @ wv + bv
    return probs, value


if __name__ == "__main__":
    # Small shapes consistent with the module: batch=8, input_dim=16,
    # n_hidden=32, n_acts=4; T=4 stacked steps for the batched path.
    B, INPUT_DIM, N_HIDDEN, N_ACTS, T = 8, 16, 32, 4, 4

    key = jax.random.PRNGKey(0)
    k_obs, k_obs_t, k_params = jax.random.split(key, 3)

    obs = jax.random.normal(k_obs, (B, INPUT_DIM), dtype=jnp.float32)
    obs_t = jax.random.normal(k_obs_t, (T, B, INPUT_DIM), dtype=jnp.float32)
    params = init_params(k_params, INPUT_DIM, N_ACTS, N_HIDDEN)
    packed = pack_head_params(params)   # packed once, outside the forward path

    # --- single-step (grid-less) kernel ---
    fwd = jax.jit(actor_critic_forward, static_argnames="n_acts")
    probs, value = jax.block_until_ready(fwd(obs, packed, n_acts=N_ACTS))

    probs_ref, value_ref = reference_forward(obs, params)
    assert probs.shape == (B, N_ACTS) and value.shape == (B, 1)
    assert jnp.allclose(probs, probs_ref, atol=1e-5, rtol=1e-5)
    assert jnp.allclose(value, value_ref, atol=1e-5, rtol=1e-5)

    # --- T-batched kernel (one launch, "parallel" grid axis) ---
    fwd_b = jax.jit(actor_critic_forward_batched, static_argnames="n_acts")
    probs_t, value_t = jax.block_until_ready(fwd_b(obs_t, packed, n_acts=N_ACTS))
    assert probs_t.shape == (T, B, N_ACTS) and value_t.shape == (T, B, 1)
    for t in range(T):
        pr, vr = reference_forward(obs_t[t], params)
        assert jnp.allclose(probs_t[t], pr, atol=1e-5, rtol=1e-5)
        assert jnp.allclose(value_t[t], vr, atol=1e-5, rtol=1e-5)

    print("KERNEL_OK")
</pallas_src>

<mosaic_0001>
module attributes {stable_mosaic.version = 11 : i64} {
  func.func @actor_critic_kernel(%arg0: memref<8x16xf32, #tpu.memory_space<vmem>>, %arg1: memref<16x32xf32, #tpu.memory_space<vmem>>, %arg2: memref<1x32xf32, #tpu.memory_space<vmem>>, %arg3: memref<32x128xf32, #tpu.memory_space<vmem>>, %arg4: memref<1x128xf32, #tpu.memory_space<vmem>>, %arg5: memref<8x128xf32, #tpu.memory_space<vmem>>) attributes {dimension_semantics = [], scalar_prefetch = 0 : i64, scratch_operands = 0 : i64, tpu.core_type = #tpu.core_type<tc>} {
    %c0 = arith.constant 0 : index
    %c0_0 = arith.constant 0 : index
    %0 = vector.load %arg0[%c0, %c0_0] : memref<8x16xf32, #tpu.memory_space<vmem>>, vector<8x16xf32>
    %c0_1 = arith.constant 0 : index
    %c0_2 = arith.constant 0 : index
    %1 = vector.load %arg1[%c0_1, %c0_2] : memref<16x32xf32, #tpu.memory_space<vmem>>, vector<16x32xf32>
    %cst = arith.constant dense<0.000000e+00> : vector<8x32xf32>
    %2 = tpu.matmul %0, %1, %cst {dimension_numbers = #tpu.dot_dimension_numbers<[1], [0], [0], [1], [0, 0, 1, 1], [], []>} : vector<8x16xf32>, vector<16x32xf32>, vector<8x32xf32> -> vector<8x32xf32>
    %c0_3 = arith.constant 0 : index
    %c0_4 = arith.constant 0 : index
    %3 = vector.load %arg2[%c0_3, %c0_4] : memref<1x32xf32, #tpu.memory_space<vmem>>, vector<1x32xf32>
    %4 = vector.broadcast %3 : vector<1x32xf32> to vector<8x32xf32>
    %5 = arith.addf %2, %4 : vector<8x32xf32>
    %cst_5 = arith.constant 0.000000e+00 : f32
    %6 = vector.broadcast %cst_5 : f32 to vector<8x32xf32>
    %7 = arith.maximumf %5, %6 : vector<8x32xf32>
    %c0_6 = arith.constant 0 : index
    %c0_7 = arith.constant 0 : index
    %8 = vector.load %arg3[%c0_6, %c0_7] : memref<32x128xf32, #tpu.memory_space<vmem>>, vector<32x128xf32>
    %cst_8 = arith.constant dense<0.000000e+00> : vector<8x128xf32>
    %9 = tpu.matmul %7, %8, %cst_8 {dimension_numbers = #tpu.dot_dimension_numbers<[1], [0], [0], [1], [0, 0, 1, 1], [], []>} : vector<8x32xf32>, vector<32x128xf32>, vector<8x128xf32> -> vector<8x128xf32>
    %c0_9 = arith.constant 0 : index
    %c0_10 = arith.constant 0 : index
    %10 = vector.load %arg4[%c0_9, %c0_10] : memref<1x128xf32, #tpu.memory_space<vmem>>, vector<1x128xf32>
    %11 = vector.broadcast %10 : vector<1x128xf32> to vector<8x128xf32>
    %12 = arith.addf %9, %11 : vector<8x128xf32>
    %cst_11 = arith.constant dense<0xFF800000> : vector<128xf32>
    %13 = vector.multi_reduction <maximumf>, %12, %cst_11 [0] : vector<8x128xf32> to vector<128xf32>
    %14 = vector.shape_cast %13 : vector<128xf32> to vector<1x128xf32>
    %15 = vector.broadcast %14 : vector<1x128xf32> to vector<8x128xf32>
    %16 = arith.subf %12, %15 : vector<8x128xf32>
    %17 = math.exp %16 : vector<8x128xf32>
    %cst_12 = arith.constant dense<0.000000e+00> : vector<128xf32>
    %18 = vector.multi_reduction <add>, %17, %cst_12 [0] : vector<8x128xf32> to vector<128xf32>
    %19 = vector.shape_cast %18 : vector<128xf32> to vector<1x128xf32>
    %20 = vector.broadcast %19 : vector<1x128xf32> to vector<8x128xf32>
    %21 = arith.divf %17, %20 : vector<8x128xf32>
    %22 = tpu.iota {dimensions = array<i32: 1>} : vector<8x128xi32>
    %c4_i32 = arith.constant 4 : i32
    %23 = vector.broadcast %c4_i32 : i32 to vector<8x128xi32>
    %24 = arith.cmpi slt, %22, %23 : vector<8x128xi32>
    %25 = arith.select %24, %21, %12 : vector<8x128xi1>, vector<8x128xf32>
    %c0_13 = arith.constant 0 : index
    %c0_14 = arith.constant 0 : index
    %26 = vector.load %arg5[%c0_13, %c0_14] : memref<8x128xf32, #tpu.memory_space<vmem>>, vector<8x128xf32>
    tpu.vector_store %arg5[%c0_13, %c0_14], %25 {strides = array<i32>} : memref<8x128xf32, #tpu.memory_space<vmem>>, vector<8x128xf32>,
    return
  }
}

</mosaic_0001>

<llo_original>
// kernel: actor_critic_forward.1
$region0: #{actor_critic_forward.1}
  #allocation0 [shape = 'u32[]', space=smem, size = 0x4, offset = 0x4, fixed_abs, tag = 'smem constant byte address 0x4 - core index']
  #allocation1 [shape = 'u32[144,128]{1,0:T(1,128)}', space=vmem, size = 0x12000, scoped, tag = 'internal scratch']
  %s0 = inlined_call_operand.vmem [shape: f32[8,16], index: 0, kind: input, shape index: {}]
  %s1 = inlined_call_operand.hbm [shape: f32[16,32], index: 1, kind: input, shape index: {}]
  %s2 = inlined_call_operand.vmem [shape: f32[1,32], index: 2, kind: input, shape index: {}]
  %s3 = inlined_call_operand.hbm [shape: f32[32,128], index: 3, kind: input, shape index: {}]
  %s4 = inlined_call_operand.hbm [shape: f32[1,128], index: 4, kind: input, shape index: {}]
  %s5 = inlined_call_operand.vmem [shape: f32[8,128], index: 5, kind: output, shape index: {}]
  %s6 = sld [smem:[#allocation0]]
  $region42: #{actor_critic_forward.1} parent=0
    _
  %s8 = ssub.s32 1, %s6
  %s9 = scalar_select 0, %s8, %s6
  $region1: #{actor_critic_forward.1} parent=0
    #allocation2 [shape = 'u8[8192]{0}', space=vmem, size = 0x2000, scoped, tag = 'input window, operand 1, single buffered']
    #allocation3 [shape = 's32[1]{0}', space=sflag, size = 0x4, scoped, tag = 'scoped memory for actor_critic_forward.1']
    #allocation4 [shape = 'u8[16384]{0}', space=vmem, size = 0x4000, scoped, tag = 'input window, operand 3, single buffered']
    #allocation5 [shape = 's32[1]{0}', space=sflag, size = 0x4, scoped, tag = 'scoped memory for actor_critic_forward.1']
    #allocation6 [shape = 'u8[512]{0}', space=vmem, size = 0x400, scoped, tag = 'input window, operand 4, single buffered']
    %10 = vsyncpa [#allocation3], 0
    %11 = vsyncpa [#allocation5], 0
    // Predicated region
    $region2: #{actor_critic_forward.1} parent=1 // pred_check
      _
    $region3: #{actor_critic_forward.1} parent=1 // pred_check_branch
      %13 = sbr.rel (0) target = $region5
    $region4: #{actor_critic_forward.1} parent=1 // pred_region
      _
    $region5: #{actor_critic_forward.1} parent=1 // pred_fallthru
      _
    // Predicated region
    $region6: #{actor_critic_forward.1} parent=1 // pred_check
      _
    $region7: #{actor_critic_forward.1} parent=1 // pred_check_branch
      %15 = sbr.rel (0) target = $region9
    $region8: #{actor_critic_forward.1} parent=1 // pred_region
      %s17 = ssub.s32 256, 256
      %18 = vsyncadd [#allocation3], %s17
      %s19 = sshll.u32 [#allocation2], 4
      %s20 = int_to_ptr.vmem [resolvable:$true] %s19
      %25 = dma.hbm_to_vmem [thread:$0]  %s1, 256, %s20, [#allocation3], 128, 128, 8
    $region9: #{actor_critic_forward.1} parent=1 // pred_fallthru
      _
    // Predicated region
    $region10: #{actor_critic_forward.1} parent=1 // pred_check
      _
    $region11: #{actor_critic_forward.1} parent=1 // pred_check_branch
      %27 = sbr.rel (0) target = $region13
    $region12: #{actor_critic_forward.1} parent=1 // pred_region
      _
    $region13: #{actor_critic_forward.1} parent=1 // pred_fallthru
      _
    // Predicated region
    $region14: #{actor_critic_forward.1} parent=1 // pred_check
      _
    $region15: #{actor_critic_forward.1} parent=1 // pred_check_branch
      %29 = sbr.rel (0) target = $region17
    $region16: #{actor_critic_forward.1} parent=1 // pred_region
      %s31 = ssub.s32 512, 512
      %32 = vsyncadd [#allocation5], %s31
      %s33 = sshll.u32 [#allocation4], 4
      %s34 = int_to_ptr.vmem [resolvable:$true] %s33
      %39 = dma.hbm_to_vmem [thread:$0]  %s3, 512, %s34, [#allocation5], 128, 128, 8
    $region17: #{actor_critic_forward.1} parent=1 // pred_fallthru
      _
    // Predicated region
    $region18: #{actor_critic_forward.1} parent=1 // pred_check
      _
    $region19: #{actor_critic_forward.1} parent=1 // pred_check_branch
      %41 = sbr.rel (0) target = $region21
    $region20: #{actor_critic_forward.1} parent=1 // pred_region
      %s43 = ssub.s32 16, 16
      %44 = vsyncadd [#allocation5], %s43
      %s46 = sshll.u32 [#allocation6], 4
      %s47 = int_to_ptr.vmem [resolvable:$true] %s46
      %49 = dma.hbm_to_vmem [thread:$0]  %s4, 16, %s47, [#allocation5]
    $region21: #{actor_critic_forward.1} parent=1 // pred_fallthru
      _
    // Predicated region
    $region22: #{actor_critic_forward.1} parent=1 // pred_check
      _
    $region23: #{actor_critic_forward.1} parent=1 // pred_check_branch
      %51 = sbr.rel (0) target = $region25
    $region24: #{actor_critic_forward.1} parent=1 // pred_region
      %52 = dma.done [#allocation3], 256
    $region25: #{actor_critic_forward.1} parent=1 // pred_fallthru
      _
    // Predicated region
    $region26: #{actor_critic_forward.1} parent=1 // pred_check
      _
    $region27: #{actor_critic_forward.1} parent=1 // pred_check_branch
      %54 = sbr.rel (0) target = $region29
    $region28: #{actor_critic_forward.1} parent=1 // pred_region
      %55 = dma.done [#allocation5], 512
    $region29: #{actor_critic_forward.1} parent=1 // pred_fallthru
      _
    // Predicated region
    $region30: #{actor_critic_forward.1} parent=1 // pred_check
      _
    $region31: #{actor_critic_forward.1} parent=1 // pred_check_branch
      %57 = sbr.rel (0) target = $region33
    $region32: #{actor_critic_forward.1} parent=1 // pred_region
      %58 = dma.done [#allocation5], 16
    $region33: #{actor_critic_forward.1} parent=1 // pred_fallthru
      _
    %v59 = vld [vmem:[%s0] sm:$0xff]
    %v60 = vld [vmem:[#allocation2] sm:$0xff]
    %v61 = vld [vmem:[#allocation2 + $0x8] sm:$0xff]
    %v62 = vld [vmem:[%s2] sm:$0x1]
    %v64 = vlaneseq
    %v65 = vshrl.u32 %v64, 7
    %v66 = vsub.s32 0, %v65
    %v67 = vrot.slane %v62, %v66
    %vm69 = vcmask 130048
    %v71 = vsel %vm69, %v59, 0
    %73 = vmatprep.subr.mxu0 0.0
    %74 = vmatpush1.msra.mxu0 %v60
    %75 = vmatprep.subr.mxu0 0.0
    %76 = vmatpush1.msra.mxu0 %v61
    %77 = vmatprep.subr.mxu0 0.0
    %78 = vmatpush1.msra.mxu0 0.0
    %79 = vmatprep.subr.mxu0 0.0
    %80 = vmatpush1.msra.mxu0 0.0
    %81 = vmatprep.subr.mxu0 0.0
    %82 = vmatpush1.msra.mxu0 0.0
    %83 = vmatprep.subr.mxu0 0.0
    %84 = vmatpush1.msra.mxu0 0.0
    %85 = vmatprep.subr.mxu0 0.0
    %86 = vmatpush1.msra.mxu0 0.0
    %87 = vmatprep.subr.mxu0 0.0
    %88 = vmatpush1.msra.mxu0 0.0
    %89 = vmatprep.subr.mxu0 0.0
    %90 = vmatpush1.msra.mxu0 0.0
    %91 = vmatprep.subr.mxu0 0.0
    %92 = vmatpush1.msra.mxu0 0.0
    %93 = vmatprep.subr.mxu0 0.0
    %94 = vmatpush1.msra.mxu0 0.0
    %95 = vmatprep.subr.mxu0 0.0
    %96 = vmatpush1.msra.mxu0 0.0
    %97 = vmatprep.subr.mxu0 0.0
    %98 = vmatpush1.msra.mxu0 0.0
    %99 = vmatprep.subr.mxu0 0.0
    %100 = vmatpush1.msra.mxu0 0.0
    %101 = vmatprep.subr.mxu0 0.0
    %102 = vmatpush1.msra.mxu0 0.0
    %103 = vmatprep.subr.mxu0 0.0
    %104 = vmatpush1.msra.mxu0 0.0
    %105 = vmatprep.subr.mxu0 0.0
    %106 = vmatpush1.msra.mxu0 0.0
    %107 = vmatprep.subr.mxu0 0.0
    %108 = vmatpush1.msra.mxu0 0.0
    %109 = vmatprep.subr.mxu0 0.0
    %110 = vmatpush1.msra.mxu0 0.0
    %111 = vmatprep.subr.mxu0 0.0
    %112 = vmatpush1.msra.mxu0 0.0
    %113 = vmatprep.subr.mxu0 0.0
    %114 = vmatpush1.msra.mxu0 0.0
    %115 = vmatprep.subr.mxu0 0.0
    %116 = vmatpush1.msra.mxu0 0.0
    %117 = vmatprep.subr.mxu0 0.0
    %118 = vmatpush1.msra.mxu0 0.0
    %119 = vmatprep.subr.mxu0 0.0
    %120 = vmatpush1.msra.mxu0 0.0
    %121 = vmatprep.subr.mxu0 0.0
    %122 = vmatpush1.msra.mxu0 0.0
    %123 = vmatprep.subr.mxu0 0.0
    %124 = vmatpush1.msra.mxu0 0.0
    %125 = vmatprep.subr.mxu0 0.0
    %126 = vmatpush1.msra.mxu0 0.0
    %127 = vmatprep.subr.mxu0 0.0
    %128 = vmatpush1.msra.mxu0 0.0
    %129 = vmatprep.subr.mxu0 0.0
    %130 = vmatpush1.msra.mxu0 0.0
    %131 = vmatprep.subr.mxu0 0.0
    %132 = vmatpush1.msra.mxu0 0.0
    %133 = vmatprep.subr.mxu0 0.0
    %134 = vmatpush1.msra.mxu0 0.0
    %135 = vmatprep.subr.mxu0 0.0
    %136 = vmatpush1.msra.mxu0 0.0
    %137 = vmatprep.mubr.f32.mxu0 0.0
    %138 = vmatmul.mubr.f32.gmra.mrb[0].mxu0 %v71
    %v139 = vpop.f32.mrb[0].mxu0
    %v140 = vadd.f32 %v67, %v139
    %v141 = vpop.f32.mrb[0].mxu0
    %142 = vdwg.mxu0
    %v143 = vmax.f32 %v140, 0.0
    %v144 = vld [vmem:[#allocation4] sm:$0xff]
    %v145 = vld [vmem:[#allocation4 + $0x8] sm:$0xff]
    %v146 = vld [vmem:[#allocation4 + $0x10] sm:$0xff]
    %v147 = vld [vmem:[#allocation4 + $0x18] sm:$0xff]
    %v148 = vld [vmem:[#allocation6] sm:$0x1]
    %v150 = vlaneseq
    %v151 = vshrl.u32 %v150, 7
    %v152 = vsub.s32 0, %v151
    %v153 = vrot.slane %v148, %v152
    %vm155 = vcmask 261120
    %v157 = vsel %vm155, %v143, 0
    %159 = vmatprep.subr.mxu0 0.0
    %160 = vmatpush1.msra.mxu0 %v144
    %161 = vmatprep.subr.mxu0 0.0
    %162 = vmatpush1.msra.mxu0 %v145
    %163 = vmatprep.subr.mxu0 0.0
    %164 = vmatpush1.msra.mxu0 %v146
    %165 = vmatprep.subr.mxu0 0.0
    %166 = vmatpush1.msra.mxu0 %v147
    %167 = vmatprep.subr.mxu0 0.0
    %168 = vmatpush1.msra.mxu0 0.0
    %169 = vmatprep.subr.mxu0 0.0
    %170 = vmatpush1.msra.mxu0 0.0
    %171 = vmatprep.subr.mxu0 0.0
    %172 = vmatpush1.msra.mxu0 0.0
    %173 = vmatprep.subr.mxu0 0.0
    %174 = vmatpush1.msra.mxu0 0.0
    %175 = vmatprep.subr.mxu0 0.0
    %176 = vmatpush1.msra.mxu0 0.0
    %177 = vmatprep.subr.mxu0 0.0
    %178 = vmatpush1.msra.mxu0 0.0
    %179 = vmatprep.subr.mxu0 0.0
    %180 = vmatpush1.msra.mxu0 0.0
    %181 = vmatprep.subr.mxu0 0.0
    %182 = vmatpush1.msra.mxu0 0.0
    %183 = vmatprep.subr.mxu0 0.0
    %184 = vmatpush1.msra.mxu0 0.0
    %185 = vmatprep.subr.mxu0 0.0
    %186 = vmatpush1.msra.mxu0 0.0
    %187 = vmatprep.subr.mxu0 0.0
    %188 = vmatpush1.msra.mxu0 0.0
    %189 = vmatprep.subr.mxu0 0.0
    %190 = vmatpush1.msra.mxu0 0.0
    %191 = vmatprep.subr.mxu0 0.0
    %192 = vmatpush1.msra.mxu0 0.0
    %193 = vmatprep.subr.mxu0 0.0
    %194 = vmatpush1.msra.mxu0 0.0
    %195 = vmatprep.subr.mxu0 0.0
    %196 = vmatpush1.msra.mxu0 0.0
    %197 = vmatprep.subr.mxu0 0.0
    %198 = vmatpush1.msra.mxu0 0.0
    %199 = vmatprep.subr.mxu0 0.0
    %200 = vmatpush1.msra.mxu0 0.0
    %201 = vmatprep.subr.mxu0 0.0
    %202 = vmatpush1.msra.mxu0 0.0
    %203 = vmatprep.subr.mxu0 0.0
    %204 = vmatpush1.msra.mxu0 0.0
    %205 = vmatprep.subr.mxu0 0.0
    %206 = vmatpush1.msra.mxu0 0.0
    %207 = vmatprep.subr.mxu0 0.0
    %208 = vmatpush1.msra.mxu0 0.0
    %209 = vmatprep.subr.mxu0 0.0
    %210 = vmatpush1.msra.mxu0 0.0
    %211 = vmatprep.subr.mxu0 0.0
    %212 = vmatpush1.msra.mxu0 0.0
    %213 = vmatprep.subr.mxu0 0.0
    %214 = vmatpush1.msra.mxu0 0.0
    %215 = vmatprep.subr.mxu0 0.0
    %216 = vmatpush1.msra.mxu0 0.0
    %217 = vmatprep.subr.mxu0 0.0
    %218 = vmatpush1.msra.mxu0 0.0
    %219 = vmatprep.subr.mxu0 0.0
    %220 = vmatpush1.msra.mxu0 0.0
    %221 = vmatprep.subr.mxu0 0.0
    %222 = vmatpush1.msra.mxu0 0.0
    %223 = vmatprep.mubr.f32.mxu0 0.0
    %224 = vmatmul.mubr.f32.gmra.mrb[0].mxu0 %v157
    %v225 = vpop.f32.mrb[0].mxu0
    %v226 = vadd.f32 %v153, %v225
    %v227 = vpop.f32.mrb[0].mxu0
    %228 = vdwg.mxu0
    %v229 = vrot.slane %v226, 4
    %v230 = vmax.f32 %v226, %v229
    %v231 = vrot.slane %v230, 2
    %v232 = vmax.f32 %v230, %v231
    %v233 = vrot.slane %v232, 1
    %v234 = vmax.f32 %v232, %v233
    %v235 = vsub.f32 %v226, %v234
    %v236 = vmul.f32 %v235, 1.442695
    %v237 = vpow.pop %v236
    %v238 = vrot.slane %v237, 4
    %v239 = vadd.f32 %v237, %v238
    %v240 = vrot.slane %v239, 2
    %v241 = vadd.f32 %v239, %v240
    %v242 = vrot.slane %v241, 1
    %v243 = vadd.f32 %v241, %v242
    %v244 = vrcp.pop %v243
    %v245 = vmul.f32 %v237, %v244
    %v246 = vlaneseq
    %v247 = vand.u32 %v246, 127
    %vm248 = vcmp.lt.s32.totalorder %v247, 4
    %v249 = vsel %vm248, %v245, %v226
    %250 = vst [vmem:[%s5] sm:$0xff] %v249
    // Predicated region
    $region34: #{actor_critic_forward.1} parent=1 // pred_check
      _
    $region35: #{actor_critic_forward.1} parent=1 // pred_check_branch
      %252 = sbr.rel (0) target = $region37
    $region36: #{actor_critic_forward.1} parent=1 // pred_region
      _
    $region37: #{actor_critic_forward.1} parent=1 // pred_fallthru
      _
    // Predicated region
    $region38: #{actor_critic_forward.1} parent=1 // pred_check
      _
    $region39: #{actor_critic_forward.1} parent=1 // pred_check_branch
      %254 = sbr.rel (0) target = $region41
    $region40: #{actor_critic_forward.1} parent=1 // pred_region
      _
    $region41: #{actor_critic_forward.1} parent=1 // pred_fallthru
      _
    %255 = vsyncpa [#allocation3], 1
    %256 = vsyncpa [#allocation5], 1

</llo_original>
